<compile_context>
chip_gen: v7x
topology: tpu7x:2x2x1
jax: 0.10.0
libtpu: 0.0.40
codegen_flags: <defaults>
</compile_context>

<pallas_src>
import jax
import jax.numpy as jnp
from jax.experimental import pallas as pl
from jax.experimental.pallas import tpu as pltpu


def mlp_kernel(x_ref, w1_ref, b1_ref, w2_ref, b2_ref, o_ref, xbf_ref):
    # x_ref : [tm, D] f32 (residual, reused across hidden chunks)
    # w1_ref: [D, th] bf16   b1_ref: [1, th] f32
    # w2_ref: [th, D] bf16   b2_ref: [1, D]  f32
    # o_ref : [tm, D] f32 (resident accumulator across hidden chunks)
    # xbf_ref: [tm, D] bf16 scratch (x cast once per batch tile)
    j = pl.program_id(1)

    @pl.when(j == 0)
    def _():
        xbf_ref[...] = x_ref[...].astype(xbf_ref.dtype)

    # fc1 chunk on the MXU (bf16 in, f32 accumulate); bias + ReLU in f32 on the VPU.
    h = jnp.dot(xbf_ref[...], w1_ref[...], preferred_element_type=jnp.float32)
    h = jnp.maximum(h + b1_ref[...], 0.0)
    # fc2 chunk, accumulated into the resident f32 output tile.
    contrib = jnp.dot(h.astype(w2_ref.dtype), w2_ref[...],
                      preferred_element_type=jnp.float32)

    @pl.when(j == 0)
    def _():
        o_ref[...] = contrib

    @pl.when(j > 0)
    def _():
        o_ref[...] += contrib

    @pl.when(j == pl.num_programs(1) - 1)
    def _():
        o_ref[...] = o_ref[...] + b2_ref[...] + x_ref[...]


def prepare_weights(fc1_w, fc1_b, fc2_w, fc2_b, compute_dtype=jnp.bfloat16):
    """One-time weight prep (call at load time, NOT per forward).

    PyTorch Linear stores W as [out, in]; we keep pre-transposed [in, out]
    copies, cast to the MXU compute dtype once, biases in f32.
    """
    w1 = jnp.asarray(fc1_w).T.astype(compute_dtype)          # [D, H]
    b1 = jnp.asarray(fc1_b).astype(jnp.float32).reshape(1, -1)  # [1, H]
    w2 = jnp.asarray(fc2_w).T.astype(compute_dtype)          # [H, D]
    b2 = jnp.asarray(fc2_b).astype(jnp.float32).reshape(1, -1)  # [1, D]
    return w1, b1, w2, b2


def mlp_forward(x, w1, b1, w2, b2, *, tm=256, th=512):
    """x: [B, D] (f32). w1: [D, H] bf16, b1: [1, H] f32, w2: [H, D] bf16, b2: [1, D] f32."""
    x = x.astype(jnp.float32)  # f32 residual + f32 accumulation in the output tile
    B, D = x.shape
    H = w1.shape[1]

    # ---- Hidden-dim chunking -------------------------------------------------
    # If the bf16 weights are small enough to live (double-buffered) in VMEM,
    # use a single chunk: weight block indices become constant over the whole
    # grid -> one HBM fetch total, resident across all batch tiles.
    weight_bytes = 2 * D * H * jnp.dtype(w1.dtype).itemsize
    if weight_bytes <= 8 * 1024 * 1024:
        th = H
    else:
        th = min(th, H)
    # Zero-pad H up to a multiple of th (padded hidden units contribute exactly 0).
    Hp = pl.cdiv(H, th) * th
    if Hp != H:
        w1 = jnp.pad(w1, ((0, 0), (0, Hp - H)))
        b1 = jnp.pad(b1, ((0, 0), (0, Hp - H)))
        w2 = jnp.pad(w2, ((0, Hp - H), (0, 0)))

    # ---- Batch tiling --------------------------------------------------------
    # 8-aligned tm (f32 sublane); ensure >= 2 batch tiles when B >= 16 so the
    # "parallel" batch axis can shard across v7x's two TensorCores.
    tm = min(tm, B)
    if B >= 16:
        tm = min(tm, max(8, B // 2))
    tm = max(8, pl.cdiv(tm, 8) * 8)
    Bp = pl.cdiv(B, tm) * tm
    if Bp != B:
        x = jnp.pad(x, ((0, Bp - B), (0, 0)))

    out = pl.pallas_call(
        mlp_kernel,
        out_shape=jax.ShapeDtypeStruct((Bp, D), jnp.float32),
        grid_spec=pltpu.PrefetchScalarGridSpec(
            num_scalar_prefetch=0,
            grid=(Bp // tm, Hp // th),
            in_specs=[
                pl.BlockSpec((tm, D), lambda i, j: (i, 0)),   # x tile (reused over j)
                pl.BlockSpec((D, th), lambda i, j: (0, j)),   # w1 H-chunk (resident if th==H)
                pl.BlockSpec((1, th), lambda i, j: (0, j)),   # b1 H-chunk
                pl.BlockSpec((th, D), lambda i, j: (j, 0)),   # w2 H-chunk (resident if th==H)
                pl.BlockSpec((1, D),  lambda i, j: (0, 0)),   # b2 (resident)
            ],
            out_specs=pl.BlockSpec((tm, D), lambda i, j: (i, 0)),
            scratch_shapes=[pltpu.VMEM((tm, D), w1.dtype)],   # bf16 copy of x, per batch tile
        ),
        compiler_params=pltpu.CompilerParams(
            dimension_semantics=("parallel", "arbitrary"),
            # 48 MiB: leaves headroom on v7x (64 MiB physical), raises v5e's
            # 16 MiB scoped default enough for larger tm/th tiles.
            vmem_limit_bytes=48 * 1024 * 1024,
        ),
    )(x, w1, b1, w2, b2)

    return out[:B] if Bp != B else out


if __name__ == "__main__":
    # Small shapes consistent with the module (in_features=128, hidden_size=512 default).
    B, D, H = 64, 128, 512

    key = jax.random.PRNGKey(0)
    kx, kw1, kb1, kw2, kb2 = jax.random.split(key, 5)

    x = jax.random.normal(kx, (B, D), dtype=jnp.float32)

    # PyTorch Linear layout: weight [out, in], bias [out].
    fc1_w = jax.random.normal(kw1, (H, D), dtype=jnp.float32) * 0.02
    fc1_b = jax.random.normal(kb1, (H,), dtype=jnp.float32) * 0.02
    fc2_w = jax.random.normal(kw2, (D, H), dtype=jnp.float32) * 0.02
    fc2_b = jax.random.normal(kb2, (D,), dtype=jnp.float32) * 0.02

    # One-time weight prep (transpose + bf16 cast) -- NOT part of the forward path.
    w1, b1, w2, b2 = prepare_weights(fc1_w, fc1_b, fc2_w, fc2_b)

    out = mlp_forward(x, w1, b1, w2, b2)
    out = jax.block_until_ready(out)

    # Reference in plain f32 JAX (matches PyTorch forward semantics).
    h_ref = jnp.maximum(x @ fc1_w.T + fc1_b, 0.0)
    ref = h_ref @ fc2_w.T + fc2_b + x

    assert out.shape == (B, D)
    # bf16 matmul inputs with f32 accumulation -> loosened tolerance.
    assert jnp.allclose(out, ref, atol=2e-2, rtol=2e-2), "mismatch vs reference"

    print("KERNEL_OK")
</pallas_src>

<mosaic_0001>
module attributes {stable_mosaic.version = 11 : i64} {
  func.func @mlp_kernel(%arg0: i32, %arg1: i32, %arg2: memref<32x128xf32, #tpu.memory_space<vmem>>, %arg3: memref<128x512xbf16, #tpu.memory_space<vmem>>, %arg4: memref<1x512xf32, #tpu.memory_space<vmem>>, %arg5: memref<512x128xbf16, #tpu.memory_space<vmem>>, %arg6: memref<1x128xf32, #tpu.memory_space<vmem>>, %arg7: memref<32x128xf32, #tpu.memory_space<vmem>>, %arg8: memref<32x128xbf16, #tpu.memory_space<vmem>>) attributes {dimension_semantics = [#tpu.dimension_semantics<parallel>, #tpu.dimension_semantics<arbitrary>], iteration_bounds = array<i64: 2, 1>, scalar_prefetch = 0 : i64, scratch_operands = 1 : i64, tpu.core_type = #tpu.core_type<tc>, window_params = [{transform_indices = @transform_0, window_bounds = array<i64: 32, 128>}, {transform_indices = @transform_1, window_bounds = array<i64: 128, 512>}, {transform_indices = @transform_2, window_bounds = array<i64: 1, 512>}, {transform_indices = @transform_3, window_bounds = array<i64: 512, 128>}, {pipeline_mode = #tpu.pipeline_mode<synchronous>, transform_indices = @transform_4, window_bounds = array<i64: 1, 128>}, {transform_indices = @transform_5, window_bounds = array<i64: 32, 128>}]} {
    %c0_i32 = arith.constant 0 : i32
    %0 = arith.cmpi eq, %arg1, %c0_i32 : i32
    %1 = arith.extui %0 : i1 to i32
    %c0_i32_0 = arith.constant 0 : i32
    %2 = arith.cmpi ne, %1, %c0_i32_0 : i32
    scf.if %2 {
      %c0_16 = arith.constant 0 : index
      %c0_17 = arith.constant 0 : index
      %23 = vector.load %arg2[%c0_16, %c0_17] : memref<32x128xf32, #tpu.memory_space<vmem>>, vector<32x128xf32>
      %24 = arith.truncf %23 : vector<32x128xf32> to vector<32x128xbf16>
      %c0_18 = arith.constant 0 : index
      %c0_19 = arith.constant 0 : index
      %25 = vector.load %arg8[%c0_18, %c0_19] : memref<32x128xbf16, #tpu.memory_space<vmem>>, vector<32x128xbf16>
      tpu.vector_store %arg8[%c0_18, %c0_19], %24 {strides = array<i32>} : memref<32x128xbf16, #tpu.memory_space<vmem>>, vector<32x128xbf16>,
    } else {
    }
    %c0 = arith.constant 0 : index
    %c0_1 = arith.constant 0 : index
    %3 = vector.load %arg8[%c0, %c0_1] : memref<32x128xbf16, #tpu.memory_space<vmem>>, vector<32x128xbf16>
    %c0_2 = arith.constant 0 : index
    %c0_3 = arith.constant 0 : index
    %4 = vector.load %arg3[%c0_2, %c0_3] : memref<128x512xbf16, #tpu.memory_space<vmem>>, vector<128x512xbf16>
    %cst = arith.constant dense<0.000000e+00> : vector<32x512xf32>
    %5 = tpu.matmul %3, %4, %cst {dimension_numbers = #tpu.dot_dimension_numbers<[1], [0], [0], [1], [0, 0, 1, 1], [], []>} : vector<32x128xbf16>, vector<128x512xbf16>, vector<32x512xf32> -> vector<32x512xf32>
    %c0_4 = arith.constant 0 : index
    %c0_5 = arith.constant 0 : index
    %6 = vector.load %arg4[%c0_4, %c0_5] : memref<1x512xf32, #tpu.memory_space<vmem>>, vector<1x512xf32>
    %7 = vector.broadcast %6 : vector<1x512xf32> to vector<32x512xf32>
    %8 = arith.addf %5, %7 : vector<32x512xf32>
    %cst_6 = arith.constant 0.000000e+00 : f32
    %9 = vector.broadcast %cst_6 : f32 to vector<32x512xf32>
    %10 = arith.maximumf %8, %9 : vector<32x512xf32>
    %11 = arith.truncf %10 : vector<32x512xf32> to vector<32x512xbf16>
    %c0_7 = arith.constant 0 : index
    %c0_8 = arith.constant 0 : index
    %12 = vector.load %arg5[%c0_7, %c0_8] : memref<512x128xbf16, #tpu.memory_space<vmem>>, vector<512x128xbf16>
    %cst_9 = arith.constant dense<0.000000e+00> : vector<32x128xf32>
    %13 = tpu.matmul %11, %12, %cst_9 {dimension_numbers = #tpu.dot_dimension_numbers<[1], [0], [0], [1], [0, 0, 1, 1], [], []>} : vector<32x512xbf16>, vector<512x128xbf16>, vector<32x128xf32> -> vector<32x128xf32>
    %c0_i32_10 = arith.constant 0 : i32
    %14 = arith.cmpi eq, %arg1, %c0_i32_10 : i32
    %15 = arith.extui %14 : i1 to i32
    %c0_i32_11 = arith.constant 0 : i32
    %16 = arith.cmpi ne, %15, %c0_i32_11 : i32
    scf.if %16 {
      %c0_16 = arith.constant 0 : index
      %c0_17 = arith.constant 0 : index
      %23 = vector.load %arg7[%c0_16, %c0_17] : memref<32x128xf32, #tpu.memory_space<vmem>>, vector<32x128xf32>
      tpu.vector_store %arg7[%c0_16, %c0_17], %13 {strides = array<i32>} : memref<32x128xf32, #tpu.memory_space<vmem>>, vector<32x128xf32>,
    } else {
    }
    %c0_i32_12 = arith.constant 0 : i32
    %17 = arith.cmpi sgt, %arg1, %c0_i32_12 : i32
    %18 = arith.extui %17 : i1 to i32
    %c0_i32_13 = arith.constant 0 : i32
    %19 = arith.cmpi ne, %18, %c0_i32_13 : i32
    scf.if %19 {
      %c0_16 = arith.constant 0 : index
      %c0_17 = arith.constant 0 : index
      %23 = vector.load %arg7[%c0_16, %c0_17] : memref<32x128xf32, #tpu.memory_space<vmem>>, vector<32x128xf32>
      %24 = arith.addf %23, %13 : vector<32x128xf32>
      %c0_18 = arith.constant 0 : index
      %c0_19 = arith.constant 0 : index
      %25 = vector.load %arg7[%c0_18, %c0_19] : memref<32x128xf32, #tpu.memory_space<vmem>>, vector<32x128xf32>
      tpu.vector_store %arg7[%c0_18, %c0_19], %24 {strides = array<i32>} : memref<32x128xf32, #tpu.memory_space<vmem>>, vector<32x128xf32>,
    } else {
    }
    %c0_i32_14 = arith.constant 0 : i32
    %20 = arith.cmpi eq, %arg1, %c0_i32_14 : i32
    %21 = arith.extui %20 : i1 to i32
    %c0_i32_15 = arith.constant 0 : i32
    %22 = arith.cmpi ne, %21, %c0_i32_15 : i32
    scf.if %22 {
      %c0_16 = arith.constant 0 : index
      %c0_17 = arith.constant 0 : index
      %23 = vector.load %arg7[%c0_16, %c0_17] : memref<32x128xf32, #tpu.memory_space<vmem>>, vector<32x128xf32>
      %c0_18 = arith.constant 0 : index
      %c0_19 = arith.constant 0 : index
      %24 = vector.load %arg6[%c0_18, %c0_19] : memref<1x128xf32, #tpu.memory_space<vmem>>, vector<1x128xf32>
      %25 = vector.broadcast %24 : vector<1x128xf32> to vector<32x128xf32>
      %26 = arith.addf %23, %25 : vector<32x128xf32>
      %c0_20 = arith.constant 0 : index
      %c0_21 = arith.constant 0 : index
      %27 = vector.load %arg2[%c0_20, %c0_21] : memref<32x128xf32, #tpu.memory_space<vmem>>, vector<32x128xf32>
      %28 = arith.addf %26, %27 : vector<32x128xf32>
      %c0_22 = arith.constant 0 : index
      %c0_23 = arith.constant 0 : index
      %29 = vector.load %arg7[%c0_22, %c0_23] : memref<32x128xf32, #tpu.memory_space<vmem>>, vector<32x128xf32>
      tpu.vector_store %arg7[%c0_22, %c0_23], %28 {strides = array<i32>} : memref<32x128xf32, #tpu.memory_space<vmem>>, vector<32x128xf32>,
    } else {
    }
    return
  }
  func.func @transform_0(%arg0: i32, %arg1: i32) -> (i32, i32) {
    %c0_i32 = arith.constant 0 : i32
    %c0_i32_0 = arith.constant 0 : i32
    return %arg0, %c0_i32 : i32, i32
  }
  func.func @transform_1(%arg0: i32, %arg1: i32) -> (i32, i32) {
    %c0_i32 = arith.constant 0 : i32
    %c0_i32_0 = arith.constant 0 : i32
    return %c0_i32, %arg1 : i32, i32
  }
  func.func @transform_2(%arg0: i32, %arg1: i32) -> (i32, i32) {
    %c0_i32 = arith.constant 0 : i32
    %c0_i32_0 = arith.constant 0 : i32
    return %c0_i32, %arg1 : i32, i32
  }
  func.func @transform_3(%arg0: i32, %arg1: i32) -> (i32, i32) {
    %c0_i32 = arith.constant 0 : i32
    %c0_i32_0 = arith.constant 0 : i32
    return %arg1, %c0_i32 : i32, i32
  }
  func.func @transform_4(%arg0: i32, %arg1: i32) -> (i32, i32) {
    %c0_i32 = arith.constant 0 : i32
    %c0_i32_0 = arith.constant 0 : i32
    %c0_i32_1 = arith.constant 0 : i32
    return %c0_i32, %c0_i32_0 : i32, i32
  }
  func.func @transform_5(%arg0: i32, %arg1: i32) -> (i32, i32) {
    %c0_i32 = arith.constant 0 : i32
    %c0_i32_0 = arith.constant 0 : i32
    return %arg0, %c0_i32 : i32, i32
  }
}

</mosaic_0001>

<llo_original>
// kernel: tpu_custom_call.1
$region0: #{tpu_custom_call.1}
  #allocation0 [shape = 'u32[]', space=smem, size = 0x4, offset = 0x4, fixed_abs, tag = 'smem constant byte address 0x4 - core index']
  #allocation1 [shape = 'u32[144,128]{1,0:T(1,128)}', space=vmem, size = 0x12000, scoped, tag = 'internal scratch']
  #allocation2 [shape = 'bf16[32,128]{1,0:T(16,128)(2,1)}', space=vmem, size = 0x2000, scoped, tag = 'scratch operand']
  %s0 = inlined_call_operand.hbm [shape: f32[64,128], index: 0, kind: input, shape index: {}]
  %s1 = inlined_call_operand.hbm [shape: bf16[128,512], index: 1, kind: input, shape index: {}]
  %s2 = inlined_call_operand.vmem [shape: f32[1,512], index: 2, kind: input, shape index: {}]
  %s3 = inlined_call_operand.hbm [shape: bf16[512,128], index: 3, kind: input, shape index: {}]
  %s4 = inlined_call_operand.vmem [shape: f32[1,128], index: 4, kind: input, shape index: {}]
  %s5 = inlined_call_operand.hbm [shape: f32[64,128], index: 5, kind: output, shape index: {}]
  %s6 = sld [smem:[#allocation0]]
  $region81: #{tpu_custom_call.1} parent=0
    _
  %s8 = ssub.s32 1, %s6
  %s9 = scalar_select 0, %s8, %s6
  $region1: #{tpu_custom_call.1} parent=0
    #allocation3 [shape = 'u8[32768]{0}', space=vmem, size = 0x8000, scoped, tag = 'input window, operand 0']
    #allocation4 [shape = 's32[2]{0}', space=sflag, size = 0x8, scoped, tag = 'scoped memory for tpu_custom_call.1']
    #allocation5 [shape = 's32[2]{0}', space=sflag, size = 0x8, scoped, tag = 'scoped memory for tpu_custom_call.1']
    #allocation6 [shape = 'u8[131072]{0}', space=vmem, size = 0x20000, scoped, tag = 'input window, operand 1, single buffered']
    #allocation7 [shape = 's32[1]{0}', space=sflag, size = 0x4, scoped, tag = 'scoped memory for tpu_custom_call.1']
    #allocation8 [shape = 'u8[131072]{0}', space=vmem, size = 0x20000, scoped, tag = 'input window, operand 3, single buffered']
    #allocation9 [shape = 'u8[32768]{0}', space=vmem, size = 0x8000, scoped, tag = 'output window, operand 0']
    %10 = vsyncpa [#allocation4], 0
    %s11 = scalar_lea.sflag [#allocation4], 1
    %12 = vsyncpa %s11, 0
    %13 = vsyncpa [#allocation7], 0
    %14 = vsyncpa [#allocation5], 0
    %s15 = scalar_lea.sflag [#allocation5], 1
    %16 = vsyncpa %s15, 0
    loop: start=0, step=1, limit=4
    $region2: #{tpu_custom_call.1} parent=1 // loop_pre_header
      _
    $region3: #{tpu_custom_call.1} parent=1 // loop_header
      %s18 = sphi 0, %s22
      %p19 = scmp.ge.s32.totalorder %s18, 4
      %s25 = sphi 0, %s37
      %s26 = sphi 0, %s33
      %s27 = sphi 0, %s25
      %s28 = sphi 0, %s26
      %s29 = sphi 0, %s27
      %s30 = sphi 0, %s28
      %s40 = sphi 0, %s42
      %s43 = sphi 0, %s40
      %s44 = sphi 0, %s43
      %s60 = sphi 0, %s44
      %s66 = sphi 0, %s68
      %s69 = sphi 0, %s66
      %s70 = sphi 0, %s69
      %s86 = sphi 0, %s70
      %s92 = sphi 0, %s94
      %s95 = sphi 0, %s92
      %s96 = sphi 0, %s95
      %s112 = sphi 0, %s96
      %s118 = sphi 0, %s120
      %s121 = sphi 0, %s118
      %s122 = sphi 0, %s121
      %s138 = sphi 0, %s122
      %s142 = sphi 0, %s142
      %s144 = sphi 0, %s142
      %s145 = sphi 0, %s144
      %s159 = sphi 0, %s145
      %s165 = sphi 0, %s167
      %s168 = sphi 0, %s165
      %s169 = sphi 0, %s168
      %s185 = sphi 0, %s169
    $region4: #{tpu_custom_call.1} parent=1 // loop_header_branch
      %21 = sbr.rel (%p19) target = $region8
    $region5: #{tpu_custom_call.1} parent=1 // loop_body
      %s23 = ssub.s32 %s18, 1
      %s24 = ssub.s32 %s18, 2
      %s31 = sadd.s32 1, %s26
      %p32 = scmp.ge.s32.totalorder %s31, 1
      %s33 = scalar_select %p32, 0, %s31
      %s34 = sadd.s32 1, %s25
      %s35 = scalar_select %p32, %s34, %s25
      %p36 = scmp.ge.s32.totalorder %s35, 2
      %s37 = scalar_select %p36, 0, %s35
      %s38 = ssub.s32 %s25, %s37
      %p39 = scmp.eq.s32.totalorder %s38, 0
      %s41 = sadd.s32 %s40, 1
      %s42 = scalar_select %p39, %s40, %s41
      %p45 = pneg %p39
      %p46 = scmp.eq.s32.totalorder %s18, 1
      %p47 = por %p45, %p46
      %p48 = scmp.ne.s32.totalorder %s40, %s43
      %p49 = scmp.eq.s32.totalorder %s18, 0
      %p50 = por %p48, %p49
      %p51 = scmp.ne.s32.totalorder %s40, %s43
      %p52 = scmp.eq.s32.totalorder %s23, 1
      %p53 = por %p51, %p52
      %p54 = scmp.ne.s32.totalorder %s43, %s44
      %p55 = scmp.eq.s32.totalorder %s23, 0
      %p56 = por %p54, %p55
      %p57 = scmp.ne.s32.totalorder %s43, %s44
      %p58 = scmp.eq.s32.totalorder %s24, 1
      %p59 = por %p57, %p58
      %p61 = scmp.ne.s32.totalorder %s44, %s60
      %p62 = scmp.eq.s32.totalorder %s24, 0
      %p63 = por %p61, %p62
      %s64 = ssub.s32 %s26, %s33
      %p65 = scmp.eq.s32.totalorder %s64, 0
      %s67 = sadd.s32 %s66, 1
      %s68 = scalar_select %p65, %s66, %s67
      %p71 = pneg %p65
      %p72 = scmp.eq.s32.totalorder %s18, 1
      %p73 = por %p71, %p72
      %p74 = scmp.ne.s32.totalorder %s66, %s69
      %p75 = scmp.eq.s32.totalorder %s18, 0
      %p76 = por %p74, %p75
      %p77 = scmp.ne.s32.totalorder %s66, %s69
      %p78 = scmp.eq.s32.totalorder %s23, 1
      %p79 = por %p77, %p78
      %p80 = scmp.ne.s32.totalorder %s69, %s70
      %p81 = scmp.eq.s32.totalorder %s23, 0
      %p82 = por %p80, %p81
      %p83 = scmp.ne.s32.totalorder %s69, %s70
      %p84 = scmp.eq.s32.totalorder %s24, 1
      %p85 = por %p83, %p84
      %p87 = scmp.ne.s32.totalorder %s70, %s86
      %p88 = scmp.eq.s32.totalorder %s24, 0
      %p89 = por %p87, %p88
      %s90 = ssub.s32 %s26, %s33
      %p91 = scmp.eq.s32.totalorder %s90, 0
      %s93 = sadd.s32 %s92, 1
      %s94 = scalar_select %p91, %s92, %s93
      %p97 = pneg %p91
      %p98 = scmp.eq.s32.totalorder %s18, 1
      %p99 = por %p97, %p98
      %p100 = scmp.ne.s32.totalorder %s92, %s95
      %p101 = scmp.eq.s32.totalorder %s18, 0
      %p102 = por %p100, %p101
      %p103 = scmp.ne.s32.totalorder %s92, %s95
      %p104 = scmp.eq.s32.totalorder %s23, 1
      %p105 = por %p103, %p104
      %p106 = scmp.ne.s32.totalorder %s95, %s96
      %p107 = scmp.eq.s32.totalorder %s23, 0
      %p108 = por %p106, %p107
      %p109 = scmp.ne.s32.totalorder %s95, %s96
      %p110 = scmp.eq.s32.totalorder %s24, 1
      %p111 = por %p109, %p110
      %p113 = scmp.ne.s32.totalorder %s96, %s112
      %p114 = scmp.eq.s32.totalorder %s24, 0
      %p115 = por %p113, %p114
      %s116 = ssub.s32 %s26, %s33
      %p117 = scmp.eq.s32.totalorder %s116, 0
      %s119 = sadd.s32 %s118, 1
      %s120 = scalar_select %p117, %s118, %s119
      %p123 = pneg %p117
      %p124 = scmp.eq.s32.totalorder %s18, 1
      %p125 = por %p123, %p124
      %p126 = scmp.ne.s32.totalorder %s118, %s121
      %p127 = scmp.eq.s32.totalorder %s18, 0
      %p128 = por %p126, %p127
      %p129 = scmp.ne.s32.totalorder %s118, %s121
      %p130 = scmp.eq.s32.totalorder %s23, 1
      %p131 = por %p129, %p130
      %p132 = scmp.ne.s32.totalorder %s121, %s122
      %p133 = scmp.eq.s32.totalorder %s23, 0
      %p134 = por %p132, %p133
      %p135 = scmp.ne.s32.totalorder %s121, %s122
      %p136 = scmp.eq.s32.totalorder %s24, 1
      %p137 = por %p135, %p136
      %p139 = scmp.ne.s32.totalorder %s122, %s138
      %p140 = scmp.eq.s32.totalorder %s24, 0
      %p141 = por %p139, %p140
      %s143 = sadd.s32 %s142, 1
      %p146 = scmp.eq.s32.totalorder %s18, 1
      %p147 = scmp.ne.s32.totalorder %s142, %s144
      %p148 = scmp.eq.s32.totalorder %s18, 0
      %p149 = por %p147, %p148
      %p150 = scmp.ne.s32.totalorder %s142, %s144
      %p151 = scmp.eq.s32.totalorder %s23, 1
      %p152 = por %p150, %p151
      %p153 = scmp.ne.s32.totalorder %s144, %s145
      %p154 = scmp.eq.s32.totalorder %s23, 0
      %p155 = por %p153, %p154
      %p156 = scmp.ne.s32.totalorder %s144, %s145
      %p157 = scmp.eq.s32.totalorder %s24, 1
      %p158 = por %p156, %p157
      %p160 = scmp.ne.s32.totalorder %s145, %s159
      %p161 = scmp.eq.s32.totalorder %s24, 0
      %p162 = por %p160, %p161
      %s163 = ssub.s32 %s25, %s37
      %p164 = scmp.eq.s32.totalorder %s163, 0
      %s166 = sadd.s32 %s165, 1
      %s167 = scalar_select %p164, %s165, %s166
      %p170 = pneg %p164
      %p171 = scmp.eq.s32.totalorder %s18, 1
      %p172 = por %p170, %p171
      %p173 = scmp.ne.s32.totalorder %s165, %s168
      %p174 = scmp.eq.s32.totalorder %s18, 0
      %p175 = por %p173, %p174
      %p176 = scmp.ne.s32.totalorder %s165, %s168
      %p177 = scmp.eq.s32.totalorder %s23, 1
      %p178 = por %p176, %p177
      %p179 = scmp.ne.s32.totalorder %s168, %s169
      %p180 = scmp.eq.s32.totalorder %s23, 0
      %p181 = por %p179, %p180
      %p182 = scmp.ne.s32.totalorder %s168, %s169
      %p183 = scmp.eq.s32.totalorder %s24, 1
      %p184 = por %p182, %p183
      %p186 = scmp.ne.s32.totalorder %s169, %s185
      %p187 = scmp.eq.s32.totalorder %s24, 0
      %p188 = por %p186, %p187
      %p189 = scmp.le.s32.totalorder 1, %s18
      %p190 = scmp.lt.s32.totalorder %s18, 3
      %p191 = pnand %p189, %p190
      %p192 = pneg %p191
      // Predicated region
      $region9: #{tpu_custom_call.1} parent=5 // pred_check
        _
      $region10: #{tpu_custom_call.1} parent=5 // pred_check_branch
        %194 = sbr.rel (%p191) target = $region12
      $region11: #{tpu_custom_call.1} parent=5 // pred_region
        %s195 = ssub.s32 %s18, 1
        // Predicated region
        $region13: #{tpu_custom_call.1} parent=11 // pred_check
          %p196 = pneg %p82
        $region14: #{tpu_custom_call.1} parent=11 // pred_check_branch
          %198 = sbr.rel (%p196) target = $region16
        $region15: #{tpu_custom_call.1} parent=11 // pred_region
          %s199 = smul.u32 4, %s28
          %s201 = ssub.s32 4096, 4096
          %202 = vsyncadd [#allocation7], %s201
          %s203 = smul.addr %s199, 64
          %s204 = scalar_lea.hbm %s1, %s203
          %s205 = sshll.u32 [#allocation6], 4
          %s206 = int_to_ptr.vmem [resolvable:$true] %s205
          %211 = dma.hbm_to_vmem [thread:$0]  %s204, 4096, %s206, [#allocation7], 256, 256, 16
        $region16: #{tpu_custom_call.1} parent=11 // pred_fallthru
          _
        // Predicated region
        $region17: #{tpu_custom_call.1} parent=11 // pred_check
          %p212 = pneg %p108
        $region18: #{tpu_custom_call.1} parent=11 // pred_check_branch
          %214 = sbr.rel (%p212) target = $region20
        $region19: #{tpu_custom_call.1} parent=11 // pred_region
          %s215 = smul.u32 4, %s28
          %p216 = scmp.lt.s32.totalorder %s215, 3
          %s217 = scalar_select %p216, %s215, 3
          %s218 = scalar_lea.vmem %s2, %s217
          %s219 = smul.u32 4, %s28
        $region20: #{tpu_custom_call.1} parent=11 // pred_fallthru
          _
        // Predicated region
        $region21: #{tpu_custom_call.1} parent=11 // pred_check
          %p220 = pneg %p134
        $region22: #{tpu_custom_call.1} parent=11 // pred_check_branch
          %222 = sbr.rel (%p220) target = $region24
        $region23: #{tpu_custom_call.1} parent=11 // pred_region
          %s223 = smul.u32 64, %s28
          %s225 = ssub.s32 4096, 4096
          %226 = vsyncadd [#allocation7], %s225
          %s227 = smul.addr %s223, 64
          %s228 = scalar_lea.hbm %s3, %s227
          %s229 = sshll.u32 [#allocation8], 4
          %s230 = int_to_ptr.vmem [resolvable:$true] %s229
          %235 = dma.hbm_to_vmem [thread:$0]  %s228, 4096, %s230, [#allocation7], 64, 64, 4
        $region24: #{tpu_custom_call.1} parent=11 // pred_fallthru
          _
        // Predicated region
        $region25: #{tpu_custom_call.1} parent=11 // pred_check
          %p236 = pneg %p155
        $region26: #{tpu_custom_call.1} parent=11 // pred_check_branch
          %238 = sbr.rel (%p236) target = $region28
        $region27: #{tpu_custom_call.1} parent=11 // pred_region
          _
        $region28: #{tpu_custom_call.1} parent=11 // pred_fallthru
          _
      $region12: #{tpu_custom_call.1} parent=5 // pred_fallthru
        _
      %p239 = scmp.lt.s32.totalorder %s18, 2
      // Predicated region
      $region29: #{tpu_custom_call.1} parent=5 // pred_check
        %p240 = pneg %p239
      $region30: #{tpu_custom_call.1} parent=5 // pred_check_branch
        %242 = sbr.rel (%p240) target = $region32
      $region31: #{tpu_custom_call.1} parent=5 // pred_region
        // Predicated region
        $region33: #{tpu_custom_call.1} parent=31 // pred_check
          %p243 = pneg %p50
        $region34: #{tpu_custom_call.1} parent=31 // pred_check_branch
          %245 = sbr.rel (%p243) target = $region36
        $region35: #{tpu_custom_call.1} parent=31 // pred_region
          %s246 = sand.u32 %s40, 1
          %s247 = scalar_lea.sflag [#allocation4], %s246
          %s248 = sand.u32 %s40, 1
          %s249 = smul.addr %s248, 32
          %s250 = scalar_lea.vmem [#allocation3], %s249
          %s251 = smul.u32 4, %s25
          %s253 = ssub.s32 512, 512
          %254 = vsyncadd %s247, %s253
          %s255 = smul.addr %s251, 128
          %s256 = scalar_lea.hbm %s0, %s255
          %s257 = sshll.u32 %s250, 4
          %s258 = int_to_ptr.vmem [resolvable:$true] %s257
          %263 = dma.hbm_to_vmem [thread:$0]  %s256, 512, %s258, %s247, 128, 128, 8
        $region36: #{tpu_custom_call.1} parent=31 // pred_fallthru
          _
      $region32: #{tpu_custom_call.1} parent=5 // pred_fallthru
        _
      %p264 = scmp.le.s32.totalorder 1, %s18
      %p265 = scmp.lt.s32.totalorder %s18, 3
      %p266 = pnand %p264, %p265
      %p267 = pneg %p266
      // Predicated region
      $region37: #{tpu_custom_call.1} parent=5 // pred_check
        _
      $region38: #{tpu_custom_call.1} parent=5 // pred_check_branch
        %269 = sbr.rel (%p266) target = $region40
      $region39: #{tpu_custom_call.1} parent=5 // pred_region
        %s270 = ssub.s32 %s18, 1
        %s271 = sand.u32 %s43, 1
        %s272 = scalar_lea.sflag [#allocation4], %s271
        %s273 = sand.u32 %s43, 1
        %s274 = smul.addr %s273, 32
        %s275 = scalar_lea.vmem [#allocation3], %s274
        // Predicated region
        $region41: #{tpu_custom_call.1} parent=39 // pred_check
          %p276 = pneg %p56
        $region42: #{tpu_custom_call.1} parent=39 // pred_check_branch
          %278 = sbr.rel (%p276) target = $region44
        $region43: #{tpu_custom_call.1} parent=39 // pred_region
          %279 = dma.done %s272, 512
        $region44: #{tpu_custom_call.1} parent=39 // pred_fallthru
          _
        // Predicated region
        $region45: #{tpu_custom_call.1} parent=39 // pred_check
          %p280 = pneg %p82
        $region46: #{tpu_custom_call.1} parent=39 // pred_check_branch
          %282 = sbr.rel (%p280) target = $region48
        $region47: #{tpu_custom_call.1} parent=39 // pred_region
          %283 = dma.done [#allocation7], 4096
        $region48: #{tpu_custom_call.1} parent=39 // pred_fallthru
          _
        // Predicated region
        $region49: #{tpu_custom_call.1} parent=39 // pred_check
          %p284 = pneg %p134
        $region50: #{tpu_custom_call.1} parent=39 // pred_check_branch
          %286 = sbr.rel (%p284) target = $region52
        $region51: #{tpu_custom_call.1} parent=39 // pred_region
          %287 = dma.done [#allocation7], 4096
        $region52: #{tpu_custom_call.1} parent=39 // pred_fallthru
          _
        %s288 = sand.u32 %s43, 1
        %s289 = scalar_lea.sflag [#allocation4], %s288
        %s290 = sand.u32 %s43, 1
        %s291 = smul.addr %s290, 32
        %s292 = scalar_lea.vmem [#allocation3], %s291
        %p293 = pneg %p56
        %p294 = pneg %p53
        %p295 = pneg %p82
        %p296 = pneg %p79
        %s297 = smul.u32 4, %s28
        %p298 = scmp.lt.s32.totalorder %s297, 3
        %s299 = scalar_select %p298, %s297, 3
        %s300 = scalar_lea.vmem %s2, %s299
        %p301 = pneg %p108
        %p302 = pneg %p105
        %p303 = pneg %p134
        %p304 = pneg %p131
        %p305 = pneg %p155
        %p306 = pneg %p152
        %p307 = pneg %p181
        %p308 = pneg %p178
        %s309 = sand.u32 %s168, 1
        %s310 = scalar_lea.sflag [#allocation5], %s309
        %s311 = sand.u32 %s168, 1
        %s312 = smul.addr %s311, 32
        %s313 = scalar_lea.vmem [#allocation9], %s312
        %s314 = smul.u32 4, %s27
        %s315 = smul.u32 4, %s28
        %s316 = smul.u32 4, %s28
        %p317 = scmp.lt.s32.totalorder %s316, 3
        %s318 = scalar_select %p317, %s316, 3
        %s319 = scalar_lea.vmem %s2, %s318
        %s320 = smul.u32 4, %s28
        %s321 = smul.u32 64, %s28
        %s322 = smul.u32 4, %s27
        %p324 = scmp.eq.s32.totalorder %s28, 0
        // Predicated region
        $region53: #{tpu_custom_call.1} parent=39 // pred_check
          %p325 = pneg %p324
        $region54: #{tpu_custom_call.1} parent=39 // pred_check_branch
          %327 = sbr.rel (%p325) target = $region56
        $region55: #{tpu_custom_call.1} parent=39 // pred_region
          %v328 = vld [vmem:[%s275] sm:$0xff]
          %v329 = vld [vmem:[%s275 + $0x8] sm:$0xff]
          %v330 = vld [vmem:[%s275 + $0x10] sm:$0xff]
          %v331 = vld [vmem:[%s275 + $0x18] sm:$0xff]
          %v332 = vpack.c.bf16 %v329, %v328
          %v333 = vpack.c.bf16 %v331, %v330
          %334 = vst [vmem:[#allocation2] sm:$0xff] %v332
          %335 = vst [vmem:[#allocation2 + $0x8] sm:$0xff] %v333
        $region56: #{tpu_custom_call.1} parent=39 // pred_fallthru
          _
        %v336 = vld [vmem:[#allocation2] sm:$0xff]
        %v337 = vld [vmem:[#allocation2 + $0x8] sm:$0xff]
        %v338 = vld [vmem:[#allocation6] sm:$0xff]
        %v339 = vld [vmem:[#allocation6 + $0x8] sm:$0xff]
        %v340 = vld [vmem:[#allocation6 + $0x10] sm:$0xff]
        %v341 = vld [vmem:[#allocation6 + $0x18] sm:$0xff]
        %v342 = vld [vmem:[#allocation6 + $0x20] sm:$0xff]
        %v343 = vld [vmem:[#allocation6 + $0x28] sm:$0xff]
        %v344 = vld [vmem:[#allocation6 + $0x30] sm:$0xff]
        %v345 = vld [vmem:[#allocation6 + $0x38] sm:$0xff]
        %v346 = vld [vmem:[#allocation6 + $0x40] sm:$0xff]
        %v347 = vld [vmem:[#allocation6 + $0x48] sm:$0xff]
        %v348 = vld [vmem:[#allocation6 + $0x50] sm:$0xff]
        %v349 = vld [vmem:[#allocation6 + $0x58] sm:$0xff]
        %v350 = vld [vmem:[#allocation6 + $0x60] sm:$0xff]
        %v351 = vld [vmem:[#allocation6 + $0x68] sm:$0xff]
        %v352 = vld [vmem:[#allocation6 + $0x70] sm:$0xff]
        %v353 = vld [vmem:[#allocation6 + $0x78] sm:$0xff]
        %v354 = vld [vmem:[#allocation6 + $0x80] sm:$0xff]
        %v355 = vld [vmem:[#allocation6 + $0x88] sm:$0xff]
        %v356 = vld [vmem:[#allocation6 + $0x90] sm:$0xff]
        %v357 = vld [vmem:[#allocation6 + $0x98] sm:$0xff]
        %v358 = vld [vmem:[#allocation6 + $0xa0] sm:$0xff]
        %v359 = vld [vmem:[#allocation6 + $0xa8] sm:$0xff]
        %v360 = vld [vmem:[#allocation6 + $0xb0] sm:$0xff]
        %v361 = vld [vmem:[#allocation6 + $0xb8] sm:$0xff]
        %v362 = vld [vmem:[#allocation6 + $0xc0] sm:$0xff]
        %v363 = vld [vmem:[#allocation6 + $0xc8] sm:$0xff]
        %v364 = vld [vmem:[#allocation6 + $0xd0] sm:$0xff]
        %v365 = vld [vmem:[#allocation6 + $0xd8] sm:$0xff]
        %v366 = vld [vmem:[#allocation6 + $0xe0] sm:$0xff]
        %v367 = vld [vmem:[#allocation6 + $0xe8] sm:$0xff]
        %v368 = vld [vmem:[#allocation6 + $0xf0] sm:$0xff]
        %v369 = vld [vmem:[#allocation6 + $0xf8] sm:$0xff]
        %v370 = vld [vmem:[%s319] sm:$0xf]
        %v372 = vlaneseq
        %v373 = vshrl.u32 %v372, 7
        %v374 = vsub.s32 0, %v373
        %v375 = vrot.slane %v370, %v374
        %v376 = vlaneseq
        %v377 = vshrl.u32 %v376, 7
        %v378 = vsub.s32 1, %v377
        %v379 = vrot.slane %v370, %v378
        %v380 = vlaneseq
        %v381 = vshrl.u32 %v380, 7
        %v382 = vsub.s32 2, %v381
        %v383 = vrot.slane %v370, %v382
        %v384 = vlaneseq
        %v385 = vshrl.u32 %v384, 7
        %v386 = vsub.s32 3, %v385
        %v387 = vrot.slane %v370, %v386
        %v424 = vunpack.c.l.b16 %v338
        %v425 = vunpack.c.h.b16 %v338
        %v426 = vunpack.c.l.b16 %v339
        %v427 = vunpack.c.h.b16 %v339
        %v428 = vunpack.c.l.b16 %v340
        %v429 = vunpack.c.h.b16 %v340
        %v430 = vunpack.c.l.b16 %v341
        %v431 = vunpack.c.h.b16 %v341
        %v432 = vunpack.c.l.b16 %v342
        %v433 = vunpack.c.h.b16 %v342
        %v434 = vunpack.c.l.b16 %v343
        %v435 = vunpack.c.h.b16 %v343
        %v436 = vunpack.c.l.b16 %v344
        %v437 = vunpack.c.h.b16 %v344
        %v438 = vunpack.c.l.b16 %v345
        %v439 = vunpack.c.h.b16 %v345
        %v440 = vunpack.c.l.b16 %v346
        %v441 = vunpack.c.h.b16 %v346
        %v442 = vunpack.c.l.b16 %v347
        %v443 = vunpack.c.h.b16 %v347
        %v444 = vunpack.c.l.b16 %v348
        %v445 = vunpack.c.h.b16 %v348
        %v446 = vunpack.c.l.b16 %v349
        %v447 = vunpack.c.h.b16 %v349
        %v448 = vunpack.c.l.b16 %v350
        %v449 = vunpack.c.h.b16 %v350
        %v450 = vunpack.c.l.b16 %v351
        %v451 = vunpack.c.h.b16 %v351
        %v452 = vunpack.c.l.b16 %v352
        %v453 = vunpack.c.h.b16 %v352
        %v454 = vunpack.c.l.b16 %v353
        %v455 = vunpack.c.h.b16 %v353
        %v456 = vunpack.c.l.b16 %v354
        %v457 = vunpack.c.h.b16 %v354
        %v458 = vunpack.c.l.b16 %v355
        %v459 = vunpack.c.h.b16 %v355
        %v460 = vunpack.c.l.b16 %v356
        %v461 = vunpack.c.h.b16 %v356
        %v462 = vunpack.c.l.b16 %v357
        %v463 = vunpack.c.h.b16 %v357
        %v464 = vunpack.c.l.b16 %v358
        %v465 = vunpack.c.h.b16 %v358
        %v466 = vunpack.c.l.b16 %v359
        %v467 = vunpack.c.h.b16 %v359
        %v468 = vunpack.c.l.b16 %v360
        %v469 = vunpack.c.h.b16 %v360
        %v470 = vunpack.c.l.b16 %v361
        %v471 = vunpack.c.h.b16 %v361
        %v472 = vunpack.c.l.b16 %v362
        %v473 = vunpack.c.h.b16 %v362
        %v474 = vunpack.c.l.b16 %v363
        %v475 = vunpack.c.h.b16 %v363
        %v476 = vunpack.c.l.b16 %v364
        %v477 = vunpack.c.h.b16 %v364
        %v478 = vunpack.c.l.b16 %v365
        %v479 = vunpack.c.h.b16 %v365
        %v480 = vunpack.c.l.b16 %v366
        %v481 = vunpack.c.h.b16 %v366
        %v482 = vunpack.c.l.b16 %v367
        %v483 = vunpack.c.h.b16 %v367
        %v484 = vunpack.c.l.b16 %v368
        %v485 = vunpack.c.h.b16 %v368
        %v486 = vunpack.c.l.b16 %v369
        %v487 = vunpack.c.h.b16 %v369
        %v488 = vpack.c.b16 %v428, %v424
        %v489 = vpack.c.b16 %v429, %v425
        %v490 = vpack.c.b16 %v430, %v426
        %v491 = vpack.c.b16 %v431, %v427
        %v492 = vpack.c.b16 %v436, %v432
        %v493 = vpack.c.b16 %v437, %v433
        %v494 = vpack.c.b16 %v438, %v434
        %v495 = vpack.c.b16 %v439, %v435
        %v496 = vpack.c.b16 %v444, %v440
        %v497 = vpack.c.b16 %v445, %v441
        %v498 = vpack.c.b16 %v446, %v442
        %v499 = vpack.c.b16 %v447, %v443
        %v500 = vpack.c.b16 %v452, %v448
        %v501 = vpack.c.b16 %v453, %v449
        %v502 = vpack.c.b16 %v454, %v450
        %v503 = vpack.c.b16 %v455, %v451
        %v504 = vpack.c.b16 %v460, %v456
        %v505 = vpack.c.b16 %v461, %v457
        %v506 = vpack.c.b16 %v462, %v458
        %v507 = vpack.c.b16 %v463, %v459
        %v508 = vpack.c.b16 %v468, %v464
        %v509 = vpack.c.b16 %v469, %v465
        %v510 = vpack.c.b16 %v470, %v466
        %v511 = vpack.c.b16 %v471, %v467
        %v512 = vpack.c.b16 %v476, %v472
        %v513 = vpack.c.b16 %v477, %v473
        %v514 = vpack.c.b16 %v478, %v474
        %v515 = vpack.c.b16 %v479, %v475
        %v516 = vpack.c.b16 %v484, %v480
        %v517 = vpack.c.b16 %v485, %v481
        %v518 = vpack.c.b16 %v486, %v482
        %v519 = vpack.c.b16 %v487, %v483
        %552 = vmatprep.subr.bf16.mxu0 %v489
        %553 = vmatpush1.bf16.msra.mxu0 %v488
        %554 = vmatprep.subr.bf16.mxu0 %v493
        %555 = vmatpush1.bf16.msra.mxu0 %v492
        %556 = vmatprep.subr.bf16.mxu0 %v497
        %557 = vmatpush1.bf16.msra.mxu0 %v496
        %558 = vmatprep.subr.bf16.mxu0 %v501
        %559 = vmatpush1.bf16.msra.mxu0 %v500
        %560 = vmatprep.subr.bf16.mxu0 %v505
        %561 = vmatpush1.bf16.msra.mxu0 %v504
        %562 = vmatprep.subr.bf16.mxu0 %v509
        %563 = vmatpush1.bf16.msra.mxu0 %v508
        %564 = vmatprep.subr.bf16.mxu0 %v513
        %565 = vmatpush1.bf16.msra.mxu0 %v512
        %566 = vmatprep.subr.bf16.mxu0 %v517
        %567 = vmatpush1.bf16.msra.mxu0 %v516
        %568 = vmatprep.subr.bf16.mxu0 0
        %569 = vmatpush1.bf16.msra.mxu0 0
        %570 = vmatprep.subr.bf16.mxu0 0
        %571 = vmatpush1.bf16.msra.mxu0 0
        %572 = vmatprep.subr.bf16.mxu0 0
        %573 = vmatpush1.bf16.msra.mxu0 0
        %574 = vmatprep.subr.bf16.mxu0 0
        %575 = vmatpush1.bf16.msra.mxu0 0
        %576 = vmatprep.subr.bf16.mxu0 0
        %577 = vmatpush1.bf16.msra.mxu0 0
        %578 = vmatprep.subr.bf16.mxu0 0
        %579 = vmatpush1.bf16.msra.mxu0 0
        %580 = vmatprep.subr.bf16.mxu0 0
        %581 = vmatpush1.bf16.msra.mxu0 0
        %582 = vmatprep.subr.bf16.mxu0 0
        %583 = vmatpush1.bf16.msra.mxu0 0
        %584 = vmatprep.mubr.bf16.mxu0 0
        %585 = vmatmul.mubr.bf16.gmra.mrb[0].mxu0 %v336
        %v586 = vpop.f32.mrb[0].mxu0
        %v587 = vadd.f32 %v375, %v586
        %v588 = vpop.f32.mrb[0].mxu0
        %v589 = vadd.f32 %v379, %v588
        %v590 = vpop.f32.mrb[0].mxu0
        %v591 = vadd.f32 %v375, %v590
        %v592 = vpop.f32.mrb[0].mxu0
        %v593 = vadd.f32 %v379, %v592
        %594 = vmatprep.mubr.bf16.mxu0 0
        %595 = vmatmul.mubr.bf16.gmra.mrb[0].mxu0 %v337
        %v596 = vpop.f32.mrb[0].mxu0
        %v597 = vadd.f32 %v375, %v596
        %v598 = vpop.f32.mrb[0].mxu0
        %v599 = vadd.f32 %v379, %v598
        %v600 = vpop.f32.mrb[0].mxu0
        %v601 = vadd.f32 %v375, %v600
        %v602 = vpop.f32.mrb[0].mxu0
        %v603 = vadd.f32 %v379, %v602
        %604 = vdwg.mxu0
        %605 = vmatprep.subr.bf16.mxu0 %v491
        %606 = vmatpush1.bf16.msra.mxu0 %v490
        %607 = vmatprep.subr.bf16.mxu0 %v495
        %608 = vmatpush1.bf16.msra.mxu0 %v494
        %609 = vmatprep.subr.bf16.mxu0 %v499
        %610 = vmatpush1.bf16.msra.mxu0 %v498
        %611 = vmatprep.subr.bf16.mxu0 %v503
        %612 = vmatpush1.bf16.msra.mxu0 %v502
        %613 = vmatprep.subr.bf16.mxu0 %v507
        %614 = vmatpush1.bf16.msra.mxu0 %v506
        %615 = vmatprep.subr.bf16.mxu0 %v511
        %616 = vmatpush1.bf16.msra.mxu0 %v510
        %617 = vmatprep.subr.bf16.mxu0 %v515
        %618 = vmatpush1.bf16.msra.mxu0 %v514
        %619 = vmatprep.subr.bf16.mxu0 %v519
        %620 = vmatpush1.bf16.msra.mxu0 %v518
        %621 = vmatprep.subr.bf16.mxu0 0
        %622 = vmatpush1.bf16.msra.mxu0 0
        %623 = vmatprep.subr.bf16.mxu0 0
        %624 = vmatpush1.bf16.msra.mxu0 0
        %625 = vmatprep.subr.bf16.mxu0 0
        %626 = vmatpush1.bf16.msra.mxu0 0
        %627 = vmatprep.subr.bf16.mxu0 0
        %628 = vmatpush1.bf16.msra.mxu0 0
        %629 = vmatprep.subr.bf16.mxu0 0
        %630 = vmatpush1.bf16.msra.mxu0 0
        %631 = vmatprep.subr.bf16.mxu0 0
        %632 = vmatpush1.bf16.msra.mxu0 0
        %633 = vmatprep.subr.bf16.mxu0 0
        %634 = vmatpush1.bf16.msra.mxu0 0
        %635 = vmatprep.subr.bf16.mxu0 0
        %636 = vmatpush1.bf16.msra.mxu0 0
        %637 = vmatprep.mubr.bf16.mxu0 0
        %638 = vmatmul.mubr.bf16.gmra.mrb[0].mxu0 %v336
        %v639 = vpop.f32.mrb[0].mxu0
        %v640 = vadd.f32 %v383, %v639
        %v641 = vpop.f32.mrb[0].mxu0
        %v642 = vadd.f32 %v387, %v641
        %v643 = vpop.f32.mrb[0].mxu0
        %v644 = vadd.f32 %v383, %v643
        %v645 = vpop.f32.mrb[0].mxu0
        %v646 = vadd.f32 %v387, %v645
        %647 = vmatprep.mubr.bf16.mxu0 0
        %648 = vmatmul.mubr.bf16.gmra.mrb[0].mxu0 %v337
        %v649 = vpop.f32.mrb[0].mxu0
        %v650 = vadd.f32 %v383, %v649
        %v651 = vpop.f32.mrb[0].mxu0
        %v652 = vadd.f32 %v387, %v651
        %v653 = vpop.f32.mrb[0].mxu0
        %v654 = vadd.f32 %v383, %v653
        %v655 = vpop.f32.mrb[0].mxu0
        %v656 = vadd.f32 %v387, %v655
        %657 = vdwg.mxu0
        %v658 = vmax.f32 %v587, 0.0
        %v659 = vmax.f32 %v589, 0.0
        %v660 = vmax.f32 %v640, 0.0
        %v661 = vmax.f32 %v642, 0.0
        %v662 = vmax.f32 %v591, 0.0
        %v663 = vmax.f32 %v593, 0.0
        %v664 = vmax.f32 %v644, 0.0
        %v665 = vmax.f32 %v646, 0.0
        %v666 = vmax.f32 %v597, 0.0
        %v667 = vmax.f32 %v599, 0.0
        %v668 = vmax.f32 %v650, 0.0
        %v669 = vmax.f32 %v652, 0.0
        %v670 = vmax.f32 %v601, 0.0
        %v671 = vmax.f32 %v603, 0.0
        %v672 = vmax.f32 %v654, 0.0
        %v673 = vmax.f32 %v656, 0.0
        %v674 = vpack.c.bf16 %v662, %v658
        %v675 = vpack.c.bf16 %v663, %v659
        %v676 = vpack.c.bf16 %v664, %v660
        %v677 = vpack.c.bf16 %v665, %v661
        %v678 = vpack.c.bf16 %v670, %v666
        %v679 = vpack.c.bf16 %v671, %v667
        %v680 = vpack.c.bf16 %v672, %v668
        %v681 = vpack.c.bf16 %v673, %v669
        %v682 = vld [vmem:[#allocation8] sm:$0xf]
        %v683 = vld [vmem:[#allocation8 + $0x4] sm:$0xf]
        %v684 = vld [vmem:[#allocation8 + $0x8] sm:$0xf]
        %v685 = vld [vmem:[#allocation8 + $0xc] sm:$0xf]
        %v686 = vld [vmem:[#allocation8 + $0x10] sm:$0xf]
        %v687 = vld [vmem:[#allocation8 + $0x14] sm:$0xf]
        %v688 = vld [vmem:[#allocation8 + $0x18] sm:$0xf]
        %v689 = vld [vmem:[#allocation8 + $0x1c] sm:$0xf]
        %v690 = vld [vmem:[#allocation8 + $0x20] sm:$0xf]
        %v691 = vld [vmem:[#allocation8 + $0x24] sm:$0xf]
        %v692 = vld [vmem:[#allocation8 + $0x28] sm:$0xf]
        %v693 = vld [vmem:[#allocation8 + $0x2c] sm:$0xf]
        %v694 = vld [vmem:[#allocation8 + $0x30] sm:$0xf]
        %v695 = vld [vmem:[#allocation8 + $0x34] sm:$0xf]
        %v696 = vld [vmem:[#allocation8 + $0x38] sm:$0xf]
        %v697 = vld [vmem:[#allocation8 + $0x3c] sm:$0xf]
        %v698 = vld [vmem:[#allocation8 + $0x40] sm:$0xf]
        %v699 = vld [vmem:[#allocation8 + $0x44] sm:$0xf]
        %v700 = vld [vmem:[#allocation8 + $0x48] sm:$0xf]
        %v701 = vld [vmem:[#allocation8 + $0x4c] sm:$0xf]
        %v702 = vld [vmem:[#allocation8 + $0x50] sm:$0xf]
        %v703 = vld [vmem:[#allocation8 + $0x54] sm:$0xf]
        %v704 = vld [vmem:[#allocation8 + $0x58] sm:$0xf]
        %v705 = vld [vmem:[#allocation8 + $0x5c] sm:$0xf]
        %v706 = vld [vmem:[#allocation8 + $0x60] sm:$0xf]
        %v707 = vld [vmem:[#allocation8 + $0x64] sm:$0xf]
        %v708 = vld [vmem:[#allocation8 + $0x68] sm:$0xf]
        %v709 = vld [vmem:[#allocation8 + $0x6c] sm:$0xf]
        %v710 = vld [vmem:[#allocation8 + $0x70] sm:$0xf]
        %v711 = vld [vmem:[#allocation8 + $0x74] sm:$0xf]
        %v712 = vld [vmem:[#allocation8 + $0x78] sm:$0xf]
        %v713 = vld [vmem:[#allocation8 + $0x7c] sm:$0xf]
        %v714 = vld [vmem:[#allocation8 + $0x80] sm:$0xf]
        %v715 = vld [vmem:[#allocation8 + $0x84] sm:$0xf]
        %v716 = vld [vmem:[#allocation8 + $0x88] sm:$0xf]
        %v717 = vld [vmem:[#allocation8 + $0x8c] sm:$0xf]
        %v718 = vld [vmem:[#allocation8 + $0x90] sm:$0xf]
        %v719 = vld [vmem:[#allocation8 + $0x94] sm:$0xf]
        %v720 = vld [vmem:[#allocation8 + $0x98] sm:$0xf]
        %v721 = vld [vmem:[#allocation8 + $0x9c] sm:$0xf]
        %v722 = vld [vmem:[#allocation8 + $0xa0] sm:$0xf]
        %v723 = vld [vmem:[#allocation8 + $0xa4] sm:$0xf]
        %v724 = vld [vmem:[#allocation8 + $0xa8] sm:$0xf]
        %v725 = vld [vmem:[#allocation8 + $0xac] sm:$0xf]
        %v726 = vld [vmem:[#allocation8 + $0xb0] sm:$0xf]
        %v727 = vld [vmem:[#allocation8 + $0xb4] sm:$0xf]
        %v728 = vld [vmem:[#allocation8 + $0xb8] sm:$0xf]
        %v729 = vld [vmem:[#allocation8 + $0xbc] sm:$0xf]
        %v730 = vld [vmem:[#allocation8 + $0xc0] sm:$0xf]
        %v731 = vld [vmem:[#allocation8 + $0xc4] sm:$0xf]
        %v732 = vld [vmem:[#allocation8 + $0xc8] sm:$0xf]
        %v733 = vld [vmem:[#allocation8 + $0xcc] sm:$0xf]
        %v734 = vld [vmem:[#allocation8 + $0xd0] sm:$0xf]
        %v735 = vld [vmem:[#allocation8 + $0xd4] sm:$0xf]
        %v736 = vld [vmem:[#allocation8 + $0xd8] sm:$0xf]
        %v737 = vld [vmem:[#allocation8 + $0xdc] sm:$0xf]
        %v738 = vld [vmem:[#allocation8 + $0xe0] sm:$0xf]
        %v739 = vld [vmem:[#allocation8 + $0xe4] sm:$0xf]
        %v740 = vld [vmem:[#allocation8 + $0xe8] sm:$0xf]
        %v741 = vld [vmem:[#allocation8 + $0xec] sm:$0xf]
        %v742 = vld [vmem:[#allocation8 + $0xf0] sm:$0xf]
        %v743 = vld [vmem:[#allocation8 + $0xf4] sm:$0xf]
        %v744 = vld [vmem:[#allocation8 + $0xf8] sm:$0xf]
        %v745 = vld [vmem:[#allocation8 + $0xfc] sm:$0xf]
        %v810 = vunpack.c.l.b16 %v682
        %v811 = vunpack.c.l.b16 %v683
        %v812 = vunpack.c.l.b16 %v684
        %v813 = vunpack.c.l.b16 %v685
        %v814 = vunpack.c.l.b16 %v686
        %v815 = vunpack.c.l.b16 %v687
        %v816 = vunpack.c.l.b16 %v688
        %v817 = vunpack.c.l.b16 %v689
        %v818 = vunpack.c.l.b16 %v690
        %v819 = vunpack.c.l.b16 %v691
        %v820 = vunpack.c.l.b16 %v692
        %v821 = vunpack.c.l.b16 %v693
        %v822 = vunpack.c.l.b16 %v694
        %v823 = vunpack.c.l.b16 %v695
        %v824 = vunpack.c.l.b16 %v696
        %v825 = vunpack.c.l.b16 %v697
        %v826 = vunpack.c.l.b16 %v698
        %v827 = vunpack.c.l.b16 %v699
        %v828 = vunpack.c.l.b16 %v700
        %v829 = vunpack.c.l.b16 %v701
        %v830 = vunpack.c.l.b16 %v702
        %v831 = vunpack.c.l.b16 %v703
        %v832 = vunpack.c.l.b16 %v704
        %v833 = vunpack.c.l.b16 %v705
        %v834 = vunpack.c.l.b16 %v706
        %v835 = vunpack.c.l.b16 %v707
        %v836 = vunpack.c.l.b16 %v708
        %v837 = vunpack.c.l.b16 %v709
        %v838 = vunpack.c.l.b16 %v710
        %v839 = vunpack.c.l.b16 %v711
        %v840 = vunpack.c.l.b16 %v712
        %v841 = vunpack.c.l.b16 %v713
        %v842 = vunpack.c.l.b16 %v714
        %v843 = vunpack.c.l.b16 %v715
        %v844 = vunpack.c.l.b16 %v716
        %v845 = vunpack.c.l.b16 %v717
        %v846 = vunpack.c.l.b16 %v718
        %v847 = vunpack.c.l.b16 %v719
        %v848 = vunpack.c.l.b16 %v720
        %v849 = vunpack.c.l.b16 %v721
        %v850 = vunpack.c.l.b16 %v722
        %v851 = vunpack.c.l.b16 %v723
        %v852 = vunpack.c.l.b16 %v724
        %v853 = vunpack.c.l.b16 %v725
        %v854 = vunpack.c.l.b16 %v726
        %v855 = vunpack.c.l.b16 %v727
        %v856 = vunpack.c.l.b16 %v728
        %v857 = vunpack.c.l.b16 %v729
        %v858 = vunpack.c.l.b16 %v730
        %v859 = vunpack.c.l.b16 %v731
        %v860 = vunpack.c.l.b16 %v732
        %v861 = vunpack.c.l.b16 %v733
        %v862 = vunpack.c.l.b16 %v734
        %v863 = vunpack.c.l.b16 %v735
        %v864 = vunpack.c.l.b16 %v736
        %v865 = vunpack.c.l.b16 %v737
        %v866 = vunpack.c.l.b16 %v738
        %v867 = vunpack.c.l.b16 %v739
        %v868 = vunpack.c.l.b16 %v740
        %v869 = vunpack.c.l.b16 %v741
        %v870 = vunpack.c.l.b16 %v742
        %v871 = vunpack.c.l.b16 %v743
        %v872 = vunpack.c.l.b16 %v744
        %v873 = vunpack.c.l.b16 %v745
        %v874 = vpack.c.b16 %v811, %v810
        %v875 = vpack.c.b16 %v813, %v812
        %v876 = vpack.c.b16 %v815, %v814
        %v877 = vpack.c.b16 %v817, %v816
        %v878 = vpack.c.b16 %v819, %v818
        %v879 = vpack.c.b16 %v821, %v820
        %v880 = vpack.c.b16 %v823, %v822
        %v881 = vpack.c.b16 %v825, %v824
        %v882 = vpack.c.b16 %v827, %v826
        %v883 = vpack.c.b16 %v829, %v828
        %v884 = vpack.c.b16 %v831, %v830
        %v885 = vpack.c.b16 %v833, %v832
        %v886 = vpack.c.b16 %v835, %v834
        %v887 = vpack.c.b16 %v837, %v836
        %v888 = vpack.c.b16 %v839, %v838
        %v889 = vpack.c.b16 %v841, %v840
        %v890 = vpack.c.b16 %v843, %v842
        %v891 = vpack.c.b16 %v845, %v844
        %v892 = vpack.c.b16 %v847, %v846
        %v893 = vpack.c.b16 %v849, %v848
        %v894 = vpack.c.b16 %v851, %v850
        %v895 = vpack.c.b16 %v853, %v852
        %v896 = vpack.c.b16 %v855, %v854
        %v897 = vpack.c.b16 %v857, %v856
        %v898 = vpack.c.b16 %v859, %v858
        %v899 = vpack.c.b16 %v861, %v860
        %v900 = vpack.c.b16 %v863, %v862
        %v901 = vpack.c.b16 %v865, %v864
        %v902 = vpack.c.b16 %v867, %v866
        %v903 = vpack.c.b16 %v869, %v868
        %v904 = vpack.c.b16 %v871, %v870
        %v905 = vpack.c.b16 %v873, %v872
        %938 = vmatprep.subr.bf16.mxu0 0
        %939 = vmatpush1.bf16.msra.mxu0 %v874
        %940 = vmatprep.subr.bf16.mxu0 0
        %941 = vmatpush1.bf16.msra.mxu0 %v875
        %942 = vmatprep.subr.bf16.mxu0 0
        %943 = vmatpush1.bf16.msra.mxu0 %v876
        %944 = vmatprep.subr.bf16.mxu0 0
        %945 = vmatpush1.bf16.msra.mxu0 %v877
        %946 = vmatprep.subr.bf16.mxu0 0
        %947 = vmatpush1.bf16.msra.mxu0 %v878
        %948 = vmatprep.subr.bf16.mxu0 0
        %949 = vmatpush1.bf16.msra.mxu0 %v879
        %950 = vmatprep.subr.bf16.mxu0 0
        %951 = vmatpush1.bf16.msra.mxu0 %v880
        %952 = vmatprep.subr.bf16.mxu0 0
        %953 = vmatpush1.bf16.msra.mxu0 %v881
        %954 = vmatprep.subr.bf16.mxu0 0
        %955 = vmatpush1.bf16.msra.mxu0 %v882
        %956 = vmatprep.subr.bf16.mxu0 0
        %957 = vmatpush1.bf16.msra.mxu0 %v883
        %958 = vmatprep.subr.bf16.mxu0 0
        %959 = vmatpush1.bf16.msra.mxu0 %v884
        %960 = vmatprep.subr.bf16.mxu0 0
        %961 = vmatpush1.bf16.msra.mxu0 %v885
        %962 = vmatprep.subr.bf16.mxu0 0
        %963 = vmatpush1.bf16.msra.mxu0 %v886
        %964 = vmatprep.subr.bf16.mxu0 0
        %965 = vmatpush1.bf16.msra.mxu0 %v887
        %966 = vmatprep.subr.bf16.mxu0 0
        %967 = vmatpush1.bf16.msra.mxu0 %v888
        %968 = vmatprep.subr.bf16.mxu0 0
        %969 = vmatpush1.bf16.msra.mxu0 %v889
        %970 = vmatprep.mubr.bf16.mxu0 %v675
        %971 = vmatmul.mubr.bf16.gmra.mrb[0].mxu0 %v674
        %v972 = vpop.f32.mrb[0].mxu0
        %v973 = vadd.f32 0.0, %v972
        %v974 = vpop.f32.mrb[0].mxu0
        %v975 = vpop.f32.mrb[0].mxu0
        %v976 = vadd.f32 0.0, %v975
        %v977 = vpop.f32.mrb[0].mxu0
        %978 = vmatprep.mubr.bf16.mxu0 %v679
        %979 = vmatmul.mubr.bf16.gmra.mrb[0].mxu0 %v678
        %v980 = vpop.f32.mrb[0].mxu0
        %v981 = vadd.f32 0.0, %v980
        %v982 = vpop.f32.mrb[0].mxu0
        %v983 = vpop.f32.mrb[0].mxu0
        %v984 = vadd.f32 0.0, %v983
        %v985 = vpop.f32.mrb[0].mxu0
        %986 = vdwg.mxu0
        %987 = vmatprep.subr.bf16.mxu0 0
        %988 = vmatpush1.bf16.msra.mxu0 %v890
        %989 = vmatprep.subr.bf16.mxu0 0
        %990 = vmatpush1.bf16.msra.mxu0 %v891
        %991 = vmatprep.subr.bf16.mxu0 0
        %992 = vmatpush1.bf16.msra.mxu0 %v892
        %993 = vmatprep.subr.bf16.mxu0 0
        %994 = vmatpush1.bf16.msra.mxu0 %v893
        %995 = vmatprep.subr.bf16.mxu0 0
        %996 = vmatpush1.bf16.msra.mxu0 %v894
        %997 = vmatprep.subr.bf16.mxu0 0
        %998 = vmatpush1.bf16.msra.mxu0 %v895
        %999 = vmatprep.subr.bf16.mxu0 0
        %1000 = vmatpush1.bf16.msra.mxu0 %v896
        %1001 = vmatprep.subr.bf16.mxu0 0
        %1002 = vmatpush1.bf16.msra.mxu0 %v897
        %1003 = vmatprep.subr.bf16.mxu0 0
        %1004 = vmatpush1.bf16.msra.mxu0 %v898
        %1005 = vmatprep.subr.bf16.mxu0 0
        %1006 = vmatpush1.bf16.msra.mxu0 %v899
        %1007 = vmatprep.subr.bf16.mxu0 0
        %1008 = vmatpush1.bf16.msra.mxu0 %v900
        %1009 = vmatprep.subr.bf16.mxu0 0
        %1010 = vmatpush1.bf16.msra.mxu0 %v901
        %1011 = vmatprep.subr.bf16.mxu0 0
        %1012 = vmatpush1.bf16.msra.mxu0 %v902
        %1013 = vmatprep.subr.bf16.mxu0 0
        %1014 = vmatpush1.bf16.msra.mxu0 %v903
        %1015 = vmatprep.subr.bf16.mxu0 0
        %1016 = vmatpush1.bf16.msra.mxu0 %v904
        %1017 = vmatprep.subr.bf16.mxu0 0
        %1018 = vmatpush1.bf16.msra.mxu0 %v905
        %1019 = vmatprep.mubr.bf16.mxu0 %v677
        %1020 = vmatmul.mubr.bf16.gmra.mrb[0].mxu0 %v676
        %v1021 = vpop.f32.mrb[0].mxu0
        %v1022 = vadd.f32 %v973, %v1021
        %v1023 = vpop.f32.mrb[0].mxu0
        %v1024 = vpop.f32.mrb[0].mxu0
        %v1025 = vadd.f32 %v976, %v1024
        %v1026 = vpop.f32.mrb[0].mxu0
        %1027 = vmatprep.mubr.bf16.mxu0 %v681
        %1028 = vmatmul.mubr.bf16.gmra.mrb[0].mxu0 %v680
        %v1029 = vpop.f32.mrb[0].mxu0
        %v1030 = vadd.f32 %v981, %v1029
        %v1031 = vpop.f32.mrb[0].mxu0
        %v1032 = vpop.f32.mrb[0].mxu0
        %v1033 = vadd.f32 %v984, %v1032
        %v1034 = vpop.f32.mrb[0].mxu0
        %1035 = vdwg.mxu0
        // Predicated region
        $region57: #{tpu_custom_call.1} parent=39 // pred_check
          %p1036 = pneg %p324
        $region58: #{tpu_custom_call.1} parent=39 // pred_check_branch
          %1038 = sbr.rel (%p1036) target = $region60
        $region59: #{tpu_custom_call.1} parent=39 // pred_region
          %1039 = vst [vmem:[%s313] sm:$0xff] %v1022
          %1040 = vst [vmem:[%s313 + $0x8] sm:$0xff] %v1025
          %1041 = vst [vmem:[%s313 + $0x10] sm:$0xff] %v1030
          %1042 = vst [vmem:[%s313 + $0x18] sm:$0xff] %v1033
        $region60: #{tpu_custom_call.1} parent=39 // pred_fallthru
          _
        %p1043 = scmp.gt.s32.totalorder %s28, 0
        // Predicated region
        $region61: #{tpu_custom_call.1} parent=39 // pred_check
          %p1044 = pneg %p1043
        $region62: #{tpu_custom_call.1} parent=39 // pred_check_branch
          %1046 = sbr.rel (%p1044) target = $region64
        $region63: #{tpu_custom_call.1} parent=39 // pred_region
          %v1047 = vld [vmem:[%s313] sm:$0xff]
          %v1048 = vld [vmem:[%s313 + $0x8] sm:$0xff]
          %v1049 = vld [vmem:[%s313 + $0x10] sm:$0xff]
          %v1050 = vld [vmem:[%s313 + $0x18] sm:$0xff]
          %v1051 = vadd.f32 %v1047, %v1022
          %v1052 = vadd.f32 %v1048, %v1025
          %v1053 = vadd.f32 %v1049, %v1030
          %v1054 = vadd.f32 %v1050, %v1033
          %1055 = vst [vmem:[%s313] sm:$0xff] %v1051
          %1056 = vst [vmem:[%s313 + $0x8] sm:$0xff] %v1052
          %1057 = vst [vmem:[%s313 + $0x10] sm:$0xff] %v1053
          %1058 = vst [vmem:[%s313 + $0x18] sm:$0xff] %v1054
        $region64: #{tpu_custom_call.1} parent=39 // pred_fallthru
          _
        // Predicated region
        $region65: #{tpu_custom_call.1} parent=39 // pred_check
          %p1059 = pneg %p324
        $region66: #{tpu_custom_call.1} parent=39 // pred_check_branch
          %1061 = sbr.rel (%p1059) target = $region68
        $region67: #{tpu_custom_call.1} parent=39 // pred_region
          %v1062 = vld [vmem:[%s313] sm:$0xff]
          %v1063 = vld [vmem:[%s313 + $0x8] sm:$0xff]
          %v1064 = vld [vmem:[%s313 + $0x10] sm:$0xff]
          %v1065 = vld [vmem:[%s313 + $0x18] sm:$0xff]
          %v1066 = vld [vmem:[%s4] sm:$0x1]
          %v1068 = vlaneseq
          %v1069 = vshrl.u32 %v1068, 7
          %v1070 = vsub.s32 0, %v1069
          %v1071 = vrot.slane %v1066, %v1070
          %v1073 = vadd.f32 %v1062, %v1071
          %v1074 = vadd.f32 %v1063, %v1071
          %v1075 = vadd.f32 %v1064, %v1071
          %v1076 = vadd.f32 %v1065, %v1071
          %v1077 = vld [vmem:[%s275] sm:$0xff]
          %v1078 = vld [vmem:[%s275 + $0x8] sm:$0xff]
          %v1079 = vld [vmem:[%s275 + $0x10] sm:$0xff]
          %v1080 = vld [vmem:[%s275 + $0x18] sm:$0xff]
          %v1081 = vadd.f32 %v1073, %v1077
          %v1082 = vadd.f32 %v1074, %v1078
          %v1083 = vadd.f32 %v1075, %v1079
          %v1084 = vadd.f32 %v1076, %v1080
          %1085 = vst [vmem:[%s313] sm:$0xff] %v1081
          %1086 = vst [vmem:[%s313 + $0x8] sm:$0xff] %v1082
          %1087 = vst [vmem:[%s313 + $0x10] sm:$0xff] %v1083
          %1088 = vst [vmem:[%s313 + $0x18] sm:$0xff] %v1084
        $region68: #{tpu_custom_call.1} parent=39 // pred_fallthru
          _
        %s1089 = sand.u32 %s168, 1
        %s1090 = scalar_lea.sflag [#allocation5], %s1089
        %s1091 = sand.u32 %s168, 1
        %s1092 = smul.addr %s1091, 32
        %s1093 = scalar_lea.vmem [#allocation9], %s1092
        // Predicated region
        $region69: #{tpu_custom_call.1} parent=39 // pred_check
          %p1094 = pneg %p178
        $region70: #{tpu_custom_call.1} parent=39 // pred_check_branch
          %1096 = sbr.rel (%p1094) target = $region72
        $region71: #{tpu_custom_call.1} parent=39 // pred_region
          %s1097 = smul.u32 4, %s27
          %s1099 = ssub.s32 512, 512
          %1100 = vsyncadd %s1090, %s1099
          %s1101 = smul.addr %s1097, 128
          %s1102 = scalar_lea.hbm %s5, %s1101
          %s1103 = sshll.u32 %s1093, 4
          %s1104 = int_to_ptr.vmem [resolvable:$true] %s1103
          %1109 = dma.vmem_to_hbm [thread:$0]  %s1104, 512, %s1102, %s1090, 128, 128, 8
        $region72: #{tpu_custom_call.1} parent=39 // pred_fallthru
          _
      $region40: #{tpu_custom_call.1} parent=5 // pred_fallthru
        _
      %p1110 = scmp.le.s32.totalorder 2, %s18
      // Predicated region
      $region73: #{tpu_custom_call.1} parent=5 // pred_check
        %p1111 = pneg %p1110
      $region74: #{tpu_custom_call.1} parent=5 // pred_check_branch
        %1113 = sbr.rel (%p1111) target = $region76
      $region75: #{tpu_custom_call.1} parent=5 // pred_region
        %s1114 = ssub.s32 %s18, 2
        // Predicated region
        $region77: #{tpu_custom_call.1} parent=75 // pred_check
          %p1115 = pneg %p184
        $region78: #{tpu_custom_call.1} parent=75 // pred_check_branch
          %1117 = sbr.rel (%p1115) target = $region80
        $region79: #{tpu_custom_call.1} parent=75 // pred_region
          %s1118 = sand.u32 %s169, 1
          %s1119 = scalar_lea.sflag [#allocation5], %s1118
          %s1120 = sand.u32 %s169, 1
          %s1121 = smul.addr %s1120, 32
          %s1122 = scalar_lea.vmem [#allocation9], %s1121
          %1123 = dma.done %s1119, 512
        $region80: #{tpu_custom_call.1} parent=75 // pred_fallthru
          _
      $region76: #{tpu_custom_call.1} parent=5 // pred_fallthru
        _
    $region6: #{tpu_custom_call.1} parent=1 // loop_footer
      %s22 = sadd.s32 1, %s18
    $region7: #{tpu_custom_call.1} parent=1 // loop_footer_branch
      %17 = sbr.rel target = $region3
    $region8: #{tpu_custom_call.1} parent=1 // loop_exit
      _
    %1124 = vsyncpa [#allocation4], 1
    %s1125 = scalar_lea.sflag [#allocation4], 1
    %1126 = vsyncpa %s1125, 1
    %1127 = vsyncpa [#allocation7], 1
    %1128 = vsyncpa [#allocation5], 1
    %s1129 = scalar_lea.sflag [#allocation5], 1
    %1130 = vsyncpa %s1129, 1

</llo_original>
